<compile_context>
chip_gen: v7x
topology: tpu7x:2x2x1
jax: 0.10.0
libtpu: 0.0.40
codegen_flags: <defaults>
</compile_context>

<pallas_src>
import jax
import jax.numpy as jnp
from jax.experimental import pallas as pl
from jax.experimental.pallas import tpu as pltpu

# ----- configuration (the kwargs of FactoredMLPNetwork) -----
NUM_INPUTS   = 52          # num_inputs
NUM_OUTPUTS  = 5           # num_outputs
HS           = [32, 32]    # hidden_sizes
BATCH        = 2
FACTOR       = 4           # kwargs['factor']      -- stored but unused in torch forward
NUM_LAYERS   = 2           # kwargs['num_layers']  -- stored but unused in torch forward
USE_LN       = False       # use_layer_norm=False path

SINGLE_TILE_MAX_B = 1024   # <= this: one block, zero extra grid-step overhead
B_TILE_MAX        = 4096   # lanes (batch rows) per grid step at large B


def _round_up(x, m):
    return ((x + m - 1) // m) * m


def mlp_kernel(x_ref, w1_ref, b1_ref, w2_ref, b2_ref, w3_ref, b3_ref,
               w4_ref, b4_ref, o_ref):
    # x block: (NUM_INPUTS, bt) bf16 — batch on the 128-lane axis.
    # All post-load math in f32 (required on v5e: no bf16 VPU ops).
    x = x_ref[...].astype(jnp.float32)
    h = jnp.maximum(jnp.dot(w1_ref[...], x,
                            preferred_element_type=jnp.float32) + b1_ref[...], 0.0)
    h = jnp.maximum(jnp.dot(w2_ref[...], h,
                            preferred_element_type=jnp.float32) + b2_ref[...], 0.0)
    h = jnp.maximum(jnp.dot(w3_ref[...], h,
                            preferred_element_type=jnp.float32) + b3_ref[...], 0.0)
    # final Linear (no activation): one lane-dense (NUM_OUTPUTS, bt) store
    o_ref[...] = jnp.dot(w4_ref[...], h,
                         preferred_element_type=jnp.float32) + b4_ref[...]


def factored_mlp_forward(x2d, params):
    """FactoredMLPNetwork.forward.  basic_operations is an empty stub in the
    torch source (returns None) -> treated as identity; then the MLP."""
    w1, b1, w2, b2, w3, b3, w4, b4 = params
    B, C = x2d.shape
    assert C == NUM_INPUTS

    # bf16 at the kernel boundary halves input DMA bytes; batch goes on the lane axis.
    x_t = x2d.astype(jnp.bfloat16).T                    # (C, B)

    if B <= SINGLE_TILE_MAX_B:
        bt = B                                          # single block, grid of 1
    else:
        # >= 2 grid steps so "parallel" shards across v7x's 2 TCs; cap at B_TILE_MAX.
        bt = min(B_TILE_MAX, _round_up(pl.cdiv(B, 2), 512))
    grid = pl.cdiv(B, bt)   # no jnp.pad: Pallas handles the ragged last block

    const = lambda i: (0, 0)    # weights/biases: constant block index -> stay resident

    out = pl.pallas_call(
        mlp_kernel,
        out_shape=jax.ShapeDtypeStruct((NUM_OUTPUTS, B), jnp.float32),
        grid_spec=pltpu.PrefetchScalarGridSpec(
            num_scalar_prefetch=0,
            grid=(grid,),
            in_specs=[
                pl.BlockSpec((C, bt), lambda i: (0, i)),
                pl.BlockSpec(w1.shape, const), pl.BlockSpec(b1.shape, const),
                pl.BlockSpec(w2.shape, const), pl.BlockSpec(b2.shape, const),
                pl.BlockSpec(w3.shape, const), pl.BlockSpec(b3.shape, const),
                pl.BlockSpec(w4.shape, const), pl.BlockSpec(b4.shape, const),
            ],
            out_specs=pl.BlockSpec((NUM_OUTPUTS, bt), lambda i: (0, i)),
        ),
        # "parallel" matters when B > SINGLE_TILE_MAX_B yields >= 2 tiles
        # (v7x megacore); with a single block it is a no-op on all generations.
        compiler_params=pltpu.CompilerParams(dimension_semantics=("parallel",)),
    )(x_t, *params)

    return out.T   # (B, NUM_OUTPUTS), matching the torch module


def init_params(key):
    """Deterministic synthetic init mirroring reset_parameters(init_form='uni'):
    torch Linear weight (out, in) ~ U(0, 1/out_features), bias ~ U(0, 1e-6).
    Weights kept in torch's (out, in) layout; biases (out, 1) for lane broadcast."""
    ks = jax.random.split(key, 8)

    def lin_w(k, cin, cout):
        return jax.random.uniform(k, (cout, cin), jnp.float32, 0.0, 1.0 / cout)

    def lin_b(k, cout):
        return jax.random.uniform(k, (cout, 1), jnp.float32, 0.0, 1e-6)

    h0, h1 = HS[0], HS[-1]
    w1 = lin_w(ks[0], NUM_INPUTS, h0);  b1 = lin_b(ks[1], h0)
    w2 = lin_w(ks[2], h1, h0);          b2 = lin_b(ks[3], h0)   # torch: Linear(hs[-1], hs[0])
    w3 = lin_w(ks[4], h0, h1);          b3 = lin_b(ks[5], h1)
    w4 = lin_w(ks[6], h1, NUM_OUTPUTS); b4 = lin_b(ks[7], NUM_OUTPUTS)
    return (w1, b1, w2, b2, w3, b3, w4, b4)


def reference_forward(x2d, params):
    """Pure-JAX f32 reference mirroring the torch BasicMLPNetwork forward."""
    w1, b1, w2, b2, w3, b3, w4, b4 = params
    h = jnp.maximum(x2d @ w1.T + b1[:, 0], 0.0)
    h = jnp.maximum(h @ w2.T + b2[:, 0], 0.0)
    h = jnp.maximum(h @ w3.T + b3[:, 0], 0.0)
    return h @ w4.T + b4[:, 0]


if __name__ == "__main__":
    key = jax.random.PRNGKey(0)
    kx, kx2, kp = jax.random.split(key, 3)
    params = init_params(kp)

    # --- small-batch path (single block, grid=1), the module's nominal use ---
    x = jax.random.normal(kx, (BATCH, NUM_INPUTS), jnp.float32)
    out = jax.block_until_ready(factored_mlp_forward(x, params))
    ref = reference_forward(x, params)
    assert out.shape == (BATCH, NUM_OUTPUTS)
    # bf16 input quantization -> compare to the f32 reference at relaxed tolerance
    assert jnp.allclose(out, ref, atol=1e-2, rtol=1e-2), (out, ref)

    # --- multi-tile path (grid=2, ragged last block, no wrapper pad) ---
    Bbig = 1536
    xb = jax.random.normal(kx2, (Bbig, NUM_INPUTS), jnp.float32)
    outb = jax.block_until_ready(factored_mlp_forward(xb, params))
    refb = reference_forward(xb, params)
    assert outb.shape == (Bbig, NUM_OUTPUTS)
    assert jnp.allclose(outb, refb, atol=1e-2, rtol=1e-2)

    # TODO(synk): basic_operations() is an empty stub in the torch source (treated as
    # identity); the use_layer_norm=True and unbatched (1-D input) paths are not implemented.
    print("KERNEL_OK")
</pallas_src>

<mosaic_0001>
module attributes {stable_mosaic.version = 11 : i64} {
  func.func @mlp_kernel(%arg0: i32, %arg1: memref<52x2xbf16, #tpu.memory_space<vmem>>, %arg2: memref<32x52xf32, #tpu.memory_space<vmem>>, %arg3: memref<32x1xf32, #tpu.memory_space<vmem>>, %arg4: memref<32x32xf32, #tpu.memory_space<vmem>>, %arg5: memref<32x1xf32, #tpu.memory_space<vmem>>, %arg6: memref<32x32xf32, #tpu.memory_space<vmem>>, %arg7: memref<32x1xf32, #tpu.memory_space<vmem>>, %arg8: memref<5x32xf32, #tpu.memory_space<vmem>>, %arg9: memref<5x1xf32, #tpu.memory_space<vmem>>, %arg10: memref<5x2xf32, #tpu.memory_space<vmem>>) attributes {dimension_semantics = [#tpu.dimension_semantics<parallel>], iteration_bounds = array<i64: 1>, scalar_prefetch = 0 : i64, scratch_operands = 0 : i64, tpu.core_type = #tpu.core_type<tc>, window_params = [{transform_indices = @transform_0, window_bounds = array<i64: 52, 2>}, {pipeline_mode = #tpu.pipeline_mode<synchronous>, transform_indices = @transform_1, window_bounds = array<i64: 32, 52>}, {pipeline_mode = #tpu.pipeline_mode<synchronous>, transform_indices = @transform_2, window_bounds = array<i64: 32, 1>}, {pipeline_mode = #tpu.pipeline_mode<synchronous>, transform_indices = @transform_3, window_bounds = array<i64: 32, 32>}, {pipeline_mode = #tpu.pipeline_mode<synchronous>, transform_indices = @transform_4, window_bounds = array<i64: 32, 1>}, {pipeline_mode = #tpu.pipeline_mode<synchronous>, transform_indices = @transform_5, window_bounds = array<i64: 32, 32>}, {pipeline_mode = #tpu.pipeline_mode<synchronous>, transform_indices = @transform_6, window_bounds = array<i64: 32, 1>}, {pipeline_mode = #tpu.pipeline_mode<synchronous>, transform_indices = @transform_7, window_bounds = array<i64: 5, 32>}, {pipeline_mode = #tpu.pipeline_mode<synchronous>, transform_indices = @transform_8, window_bounds = array<i64: 5, 1>}, {transform_indices = @transform_9, window_bounds = array<i64: 5, 2>}]} {
    %c0 = arith.constant 0 : index
    %c0_0 = arith.constant 0 : index
    %0 = vector.load %arg1[%c0, %c0_0] : memref<52x2xbf16, #tpu.memory_space<vmem>>, vector<52x2xbf16>
    %1 = arith.extf %0 : vector<52x2xbf16> to vector<52x2xf32>
    %c0_1 = arith.constant 0 : index
    %c0_2 = arith.constant 0 : index
    %2 = vector.load %arg2[%c0_1, %c0_2] : memref<32x52xf32, #tpu.memory_space<vmem>>, vector<32x52xf32>
    %cst = arith.constant dense<0.000000e+00> : vector<32x2xf32>
    %3 = tpu.matmul %2, %1, %cst {dimension_numbers = #tpu.dot_dimension_numbers<[1], [0], [0], [1], [0, 0, 1, 1], [], []>} : vector<32x52xf32>, vector<52x2xf32>, vector<32x2xf32> -> vector<32x2xf32>
    %c0_3 = arith.constant 0 : index
    %c0_4 = arith.constant 0 : index
    %4 = vector.load %arg3[%c0_3, %c0_4] : memref<32x1xf32, #tpu.memory_space<vmem>>, vector<32x1xf32>
    %5 = vector.broadcast %4 : vector<32x1xf32> to vector<32x2xf32>
    %6 = arith.addf %3, %5 : vector<32x2xf32>
    %cst_5 = arith.constant 0.000000e+00 : f32
    %7 = vector.broadcast %cst_5 : f32 to vector<32x2xf32>
    %8 = arith.maximumf %6, %7 : vector<32x2xf32>
    %c0_6 = arith.constant 0 : index
    %c0_7 = arith.constant 0 : index
    %9 = vector.load %arg4[%c0_6, %c0_7] : memref<32x32xf32, #tpu.memory_space<vmem>>, vector<32x32xf32>
    %cst_8 = arith.constant dense<0.000000e+00> : vector<32x2xf32>
    %10 = tpu.matmul %9, %8, %cst_8 {dimension_numbers = #tpu.dot_dimension_numbers<[1], [0], [0], [1], [0, 0, 1, 1], [], []>} : vector<32x32xf32>, vector<32x2xf32>, vector<32x2xf32> -> vector<32x2xf32>
    %c0_9 = arith.constant 0 : index
    %c0_10 = arith.constant 0 : index
    %11 = vector.load %arg5[%c0_9, %c0_10] : memref<32x1xf32, #tpu.memory_space<vmem>>, vector<32x1xf32>
    %12 = vector.broadcast %11 : vector<32x1xf32> to vector<32x2xf32>
    %13 = arith.addf %10, %12 : vector<32x2xf32>
    %cst_11 = arith.constant 0.000000e+00 : f32
    %14 = vector.broadcast %cst_11 : f32 to vector<32x2xf32>
    %15 = arith.maximumf %13, %14 : vector<32x2xf32>
    %c0_12 = arith.constant 0 : index
    %c0_13 = arith.constant 0 : index
    %16 = vector.load %arg6[%c0_12, %c0_13] : memref<32x32xf32, #tpu.memory_space<vmem>>, vector<32x32xf32>
    %cst_14 = arith.constant dense<0.000000e+00> : vector<32x2xf32>
    %17 = tpu.matmul %16, %15, %cst_14 {dimension_numbers = #tpu.dot_dimension_numbers<[1], [0], [0], [1], [0, 0, 1, 1], [], []>} : vector<32x32xf32>, vector<32x2xf32>, vector<32x2xf32> -> vector<32x2xf32>
    %c0_15 = arith.constant 0 : index
    %c0_16 = arith.constant 0 : index
    %18 = vector.load %arg7[%c0_15, %c0_16] : memref<32x1xf32, #tpu.memory_space<vmem>>, vector<32x1xf32>
    %19 = vector.broadcast %18 : vector<32x1xf32> to vector<32x2xf32>
    %20 = arith.addf %17, %19 : vector<32x2xf32>
    %cst_17 = arith.constant 0.000000e+00 : f32
    %21 = vector.broadcast %cst_17 : f32 to vector<32x2xf32>
    %22 = arith.maximumf %20, %21 : vector<32x2xf32>
    %c0_18 = arith.constant 0 : index
    %c0_19 = arith.constant 0 : index
    %23 = vector.load %arg8[%c0_18, %c0_19] : memref<5x32xf32, #tpu.memory_space<vmem>>, vector<5x32xf32>
    %cst_20 = arith.constant dense<0.000000e+00> : vector<5x2xf32>
    %24 = tpu.matmul %23, %22, %cst_20 {dimension_numbers = #tpu.dot_dimension_numbers<[1], [0], [0], [1], [0, 0, 1, 1], [], []>} : vector<5x32xf32>, vector<32x2xf32>, vector<5x2xf32> -> vector<5x2xf32>
    %c0_21 = arith.constant 0 : index
    %c0_22 = arith.constant 0 : index
    %25 = vector.load %arg9[%c0_21, %c0_22] : memref<5x1xf32, #tpu.memory_space<vmem>>, vector<5x1xf32>
    %26 = vector.broadcast %25 : vector<5x1xf32> to vector<5x2xf32>
    %27 = arith.addf %24, %26 : vector<5x2xf32>
    %c0_23 = arith.constant 0 : index
    %c0_24 = arith.constant 0 : index
    %28 = vector.load %arg10[%c0_23, %c0_24] : memref<5x2xf32, #tpu.memory_space<vmem>>, vector<5x2xf32>
    tpu.vector_store %arg10[%c0_23, %c0_24], %27 {strides = array<i32>} : memref<5x2xf32, #tpu.memory_space<vmem>>, vector<5x2xf32>,
    return
  }
  func.func @transform_0(%arg0: i32) -> (i32, i32) {
    %c0_i32 = arith.constant 0 : i32
    %c0_i32_0 = arith.constant 0 : i32
    return %c0_i32, %arg0 : i32, i32
  }
  func.func @transform_1(%arg0: i32) -> (i32, i32) {
    %c0_i32 = arith.constant 0 : i32
    %c0_i32_0 = arith.constant 0 : i32
    %c0_i32_1 = arith.constant 0 : i32
    return %c0_i32, %c0_i32_0 : i32, i32
  }
  func.func @transform_2(%arg0: i32) -> (i32, i32) {
    %c0_i32 = arith.constant 0 : i32
    %c0_i32_0 = arith.constant 0 : i32
    %c0_i32_1 = arith.constant 0 : i32
    return %c0_i32, %c0_i32_0 : i32, i32
  }
  func.func @transform_3(%arg0: i32) -> (i32, i32) {
    %c0_i32 = arith.constant 0 : i32
    %c0_i32_0 = arith.constant 0 : i32
    %c0_i32_1 = arith.constant 0 : i32
    return %c0_i32, %c0_i32_0 : i32, i32
  }
  func.func @transform_4(%arg0: i32) -> (i32, i32) {
    %c0_i32 = arith.constant 0 : i32
    %c0_i32_0 = arith.constant 0 : i32
    %c0_i32_1 = arith.constant 0 : i32
    return %c0_i32, %c0_i32_0 : i32, i32
  }
  func.func @transform_5(%arg0: i32) -> (i32, i32) {
    %c0_i32 = arith.constant 0 : i32
    %c0_i32_0 = arith.constant 0 : i32
    %c0_i32_1 = arith.constant 0 : i32
    return %c0_i32, %c0_i32_0 : i32, i32
  }
  func.func @transform_6(%arg0: i32) -> (i32, i32) {
    %c0_i32 = arith.constant 0 : i32
    %c0_i32_0 = arith.constant 0 : i32
    %c0_i32_1 = arith.constant 0 : i32
    return %c0_i32, %c0_i32_0 : i32, i32
  }
  func.func @transform_7(%arg0: i32) -> (i32, i32) {
    %c0_i32 = arith.constant 0 : i32
    %c0_i32_0 = arith.constant 0 : i32
    %c0_i32_1 = arith.constant 0 : i32
    return %c0_i32, %c0_i32_0 : i32, i32
  }
  func.func @transform_8(%arg0: i32) -> (i32, i32) {
    %c0_i32 = arith.constant 0 : i32
    %c0_i32_0 = arith.constant 0 : i32
    %c0_i32_1 = arith.constant 0 : i32
    return %c0_i32, %c0_i32_0 : i32, i32
  }
  func.func @transform_9(%arg0: i32) -> (i32, i32) {
    %c0_i32 = arith.constant 0 : i32
    %c0_i32_0 = arith.constant 0 : i32
    return %c0_i32, %arg0 : i32, i32
  }
}

</mosaic_0001>

<llo_original>
// kernel: tpu_custom_call.1
$region0: #{tpu_custom_call.1}
  #allocation0 [shape = 'u32[]', space=smem, size = 0x4, offset = 0x4, fixed_abs, tag = 'smem constant byte address 0x4 - core index']
  #allocation1 [shape = 'u32[144,128]{1,0:T(1,128)}', space=vmem, size = 0x12000, scoped, tag = 'internal scratch']
  %s0 = inlined_call_operand.vmem [shape: bf16[52,2], index: 0, kind: input, shape index: {}]
  %s1 = inlined_call_operand.vmem [shape: f32[32,52], index: 1, kind: input, shape index: {}]
  %s2 = inlined_call_operand.vmem [shape: f32[32,1], index: 2, kind: input, shape index: {}]
  %s3 = inlined_call_operand.vmem [shape: f32[32,32], index: 3, kind: input, shape index: {}]
  %s4 = inlined_call_operand.vmem [shape: f32[32,1], index: 4, kind: input, shape index: {}]
  %s5 = inlined_call_operand.vmem [shape: f32[32,32], index: 5, kind: input, shape index: {}]
  %s6 = inlined_call_operand.vmem [shape: f32[32,1], index: 6, kind: input, shape index: {}]
  %s7 = inlined_call_operand.vmem [shape: f32[5,32], index: 7, kind: input, shape index: {}]
  %s8 = inlined_call_operand.vmem [shape: f32[5,1], index: 8, kind: input, shape index: {}]
  %s9 = inlined_call_operand.vmem [shape: f32[5,2], index: 9, kind: output, shape index: {}]
  %s10 = sld [smem:[#allocation0]]
  $region46: #{tpu_custom_call.1} parent=0
    _
  %s12 = ssub.s32 1, %s10
  %s13 = scalar_select 0, %s12, %s10
  // Predicated region
  $region2: #{tpu_custom_call.1} parent=0 // pred_check
    _
  $region3: #{tpu_custom_call.1} parent=0 // pred_check_branch
    %15 = sbr.rel (0) target = $region5
  $region4: #{tpu_custom_call.1} parent=0 // pred_region
    _
  $region5: #{tpu_custom_call.1} parent=0 // pred_fallthru
    _
  // Predicated region
  $region6: #{tpu_custom_call.1} parent=0 // pred_check
    _
  $region7: #{tpu_custom_call.1} parent=0 // pred_check_branch
    %17 = sbr.rel (0) target = $region9
  $region8: #{tpu_custom_call.1} parent=0 // pred_region
    _
  $region9: #{tpu_custom_call.1} parent=0 // pred_fallthru
    _
  // Predicated region
  $region10: #{tpu_custom_call.1} parent=0 // pred_check
    _
  $region11: #{tpu_custom_call.1} parent=0 // pred_check_branch
    %19 = sbr.rel (0) target = $region13
  $region12: #{tpu_custom_call.1} parent=0 // pred_region
    _
  $region13: #{tpu_custom_call.1} parent=0 // pred_fallthru
    _
  // Predicated region
  $region14: #{tpu_custom_call.1} parent=0 // pred_check
    _
  $region15: #{tpu_custom_call.1} parent=0 // pred_check_branch
    %21 = sbr.rel (0) target = $region17
  $region16: #{tpu_custom_call.1} parent=0 // pred_region
    _
  $region17: #{tpu_custom_call.1} parent=0 // pred_fallthru
    _
  // Predicated region
  $region18: #{tpu_custom_call.1} parent=0 // pred_check
    _
  $region19: #{tpu_custom_call.1} parent=0 // pred_check_branch
    %23 = sbr.rel (0) target = $region21
  $region20: #{tpu_custom_call.1} parent=0 // pred_region
    _
  $region21: #{tpu_custom_call.1} parent=0 // pred_fallthru
    _
  // Predicated region
  $region22: #{tpu_custom_call.1} parent=0 // pred_check
    _
  $region23: #{tpu_custom_call.1} parent=0 // pred_check_branch
    %25 = sbr.rel (0) target = $region25
  $region24: #{tpu_custom_call.1} parent=0 // pred_region
    _
  $region25: #{tpu_custom_call.1} parent=0 // pred_fallthru
    _
  // Predicated region
  $region26: #{tpu_custom_call.1} parent=0 // pred_check
    _
  $region27: #{tpu_custom_call.1} parent=0 // pred_check_branch
    %27 = sbr.rel (0) target = $region29
  $region28: #{tpu_custom_call.1} parent=0 // pred_region
    _
  $region29: #{tpu_custom_call.1} parent=0 // pred_fallthru
    _
  // Predicated region
  $region30: #{tpu_custom_call.1} parent=0 // pred_check
    _
  $region31: #{tpu_custom_call.1} parent=0 // pred_check_branch
    %29 = sbr.rel (0) target = $region33
  $region32: #{tpu_custom_call.1} parent=0 // pred_region
    _
  $region33: #{tpu_custom_call.1} parent=0 // pred_fallthru
    _
  // Predicated region
  $region34: #{tpu_custom_call.1} parent=0 // pred_check
    _
  $region35: #{tpu_custom_call.1} parent=0 // pred_check_branch
    %31 = sbr.rel (0) target = $region37
  $region36: #{tpu_custom_call.1} parent=0 // pred_region
    _
  $region37: #{tpu_custom_call.1} parent=0 // pred_fallthru
    _
  %v32 = vld [vmem:[%s0] sm:$0xf]
  %v33 = vld [vmem:[%s0 + $0x4] sm:$0xf]
  %v34 = vld [vmem:[%s0 + $0x8] sm:$0xf]
  %v35 = vld [vmem:[%s0 + $0xc] sm:$0xf]
  %v36 = vld [vmem:[%s0 + $0x10] sm:$0xf]
  %v37 = vld [vmem:[%s0 + $0x14] sm:$0xf]
  %v38 = vld [vmem:[%s0 + $0x18] sm:$0x3]
  %v39 = vunpack.c.l.bf16 %v32
  %v40 = vunpack.c.l.bf16 %v33
  %v41 = vunpack.c.l.bf16 %v34
  %v42 = vunpack.c.l.bf16 %v35
  %v43 = vunpack.c.l.bf16 %v36
  %v44 = vunpack.c.l.bf16 %v37
  %v45 = vunpack.c.l.bf16 %v38
  %v46 = vld [vmem:[%s1] sm:$0xff]
  %v47 = vld [vmem:[%s1 + $0x8] sm:$0xff]
  %v48 = vld [vmem:[%s1 + $0x10] sm:$0xff]
  %v49 = vld [vmem:[%s1 + $0x18] sm:$0xff]
  %v50 = vld [vmem:[%s2] sm:$0xff]
  %v51 = vld [vmem:[%s2 + $0x8] sm:$0xff]
  %v52 = vld [vmem:[%s2 + $0x10] sm:$0xff]
  %v53 = vld [vmem:[%s2 + $0x18] sm:$0xff]
  %55 = vset.pattern.permute.xlu0 0
  %56 = vperm.xlu0 %55, %v50
  %v57 = vpop.permute.xlu0 %56
  %60 = vset.pattern.permute.xlu0 0
  %61 = vperm.xlu0 %60, %v51
  %v62 = vpop.permute.xlu0 %61
  %65 = vset.pattern.permute.xlu0 0
  %66 = vperm.xlu0 %65, %v52
  %v67 = vpop.permute.xlu0 %66
  %70 = vset.pattern.permute.xlu0 0
  %71 = vperm.xlu0 %70, %v53
  %v72 = vpop.permute.xlu0 %71
  %vm74 = vcmask 424960
  %v76 = vsel %vm74, %v46, 0
  %v79 = vsel %vm74, %v47, 0
  %v82 = vsel %vm74, %v48, 0
  %v85 = vsel %vm74, %v49, 0
  %vm87 = vcmask 1043456
  %v89 = vsel %vm87, %v45, 0
  %91 = vmatprep.subr.mxu0 0.0
  %92 = vmatpush1.msra.mxu0 %v39
  %93 = vmatprep.subr.mxu0 0.0
  %94 = vmatpush1.msra.mxu0 %v40
  %95 = vmatprep.subr.mxu0 0.0
  %96 = vmatpush1.msra.mxu0 %v41
  %97 = vmatprep.subr.mxu0 0.0
  %98 = vmatpush1.msra.mxu0 %v42
  %99 = vmatprep.subr.mxu0 0.0
  %100 = vmatpush1.msra.mxu0 %v43
  %101 = vmatprep.subr.mxu0 0.0
  %102 = vmatpush1.msra.mxu0 %v44
  %103 = vmatprep.subr.mxu0 0.0
  %104 = vmatpush1.msra.mxu0 %v89
  %105 = vmatprep.subr.mxu0 0.0
  %106 = vmatpush1.msra.mxu0 0.0
  %107 = vmatprep.subr.mxu0 0.0
  %108 = vmatpush1.msra.mxu0 0.0
  %109 = vmatprep.subr.mxu0 0.0
  %110 = vmatpush1.msra.mxu0 0.0
  %111 = vmatprep.subr.mxu0 0.0
  %112 = vmatpush1.msra.mxu0 0.0
  %113 = vmatprep.subr.mxu0 0.0
  %114 = vmatpush1.msra.mxu0 0.0
  %115 = vmatprep.subr.mxu0 0.0
  %116 = vmatpush1.msra.mxu0 0.0
  %117 = vmatprep.subr.mxu0 0.0
  %118 = vmatpush1.msra.mxu0 0.0
  %119 = vmatprep.subr.mxu0 0.0
  %120 = vmatpush1.msra.mxu0 0.0
  %121 = vmatprep.subr.mxu0 0.0
  %122 = vmatpush1.msra.mxu0 0.0
  %123 = vmatprep.subr.mxu0 0.0
  %124 = vmatpush1.msra.mxu0 0.0
  %125 = vmatprep.subr.mxu0 0.0
  %126 = vmatpush1.msra.mxu0 0.0
  %127 = vmatprep.subr.mxu0 0.0
  %128 = vmatpush1.msra.mxu0 0.0
  %129 = vmatprep.subr.mxu0 0.0
  %130 = vmatpush1.msra.mxu0 0.0
  %131 = vmatprep.subr.mxu0 0.0
  %132 = vmatpush1.msra.mxu0 0.0
  %133 = vmatprep.subr.mxu0 0.0
  %134 = vmatpush1.msra.mxu0 0.0
  %135 = vmatprep.subr.mxu0 0.0
  %136 = vmatpush1.msra.mxu0 0.0
  %137 = vmatprep.subr.mxu0 0.0
  %138 = vmatpush1.msra.mxu0 0.0
  %139 = vmatprep.subr.mxu0 0.0
  %140 = vmatpush1.msra.mxu0 0.0
  %141 = vmatprep.subr.mxu0 0.0
  %142 = vmatpush1.msra.mxu0 0.0
  %143 = vmatprep.subr.mxu0 0.0
  %144 = vmatpush1.msra.mxu0 0.0
  %145 = vmatprep.subr.mxu0 0.0
  %146 = vmatpush1.msra.mxu0 0.0
  %147 = vmatprep.subr.mxu0 0.0
  %148 = vmatpush1.msra.mxu0 0.0
  %149 = vmatprep.subr.mxu0 0.0
  %150 = vmatpush1.msra.mxu0 0.0
  %151 = vmatprep.subr.mxu0 0.0
  %152 = vmatpush1.msra.mxu0 0.0
  %153 = vmatprep.subr.mxu0 0.0
  %154 = vmatpush1.msra.mxu0 0.0
  %155 = vmatprep.mubr.f32.mxu0 0.0
  %156 = vmatmul.mubr.f32.gmra.mrb[0].mxu0 %v76
  %v157 = vpop.f32.mrb[0].mxu0
  %v158 = vadd.f32 %v57, %v157
  %v159 = vpop.f32.mrb[0].mxu0
  %160 = vmatprep.mubr.f32.mxu0 0.0
  %161 = vmatmul.mubr.f32.gmra.mrb[0].mxu0 %v79
  %v162 = vpop.f32.mrb[0].mxu0
  %v163 = vadd.f32 %v62, %v162
  %v164 = vpop.f32.mrb[0].mxu0
  %165 = vmatprep.mubr.f32.mxu0 0.0
  %166 = vmatmul.mubr.f32.gmra.mrb[0].mxu0 %v82
  %v167 = vpop.f32.mrb[0].mxu0
  %v168 = vadd.f32 %v67, %v167
  %v169 = vpop.f32.mrb[0].mxu0
  %170 = vmatprep.mubr.f32.mxu0 0.0
  %171 = vmatmul.mubr.f32.gmra.mrb[0].mxu0 %v85
  %v172 = vpop.f32.mrb[0].mxu0
  %v173 = vadd.f32 %v72, %v172
  %v174 = vpop.f32.mrb[0].mxu0
  %175 = vdwg.mxu0
  %v176 = vmax.f32 %v158, 0.0
  %v177 = vmax.f32 %v163, 0.0
  %v178 = vmax.f32 %v168, 0.0
  %v179 = vmax.f32 %v173, 0.0
  %v180 = vld [vmem:[%s3] sm:$0xff]
  %v181 = vld [vmem:[%s3 + $0x8] sm:$0xff]
  %v182 = vld [vmem:[%s3 + $0x10] sm:$0xff]
  %v183 = vld [vmem:[%s3 + $0x18] sm:$0xff]
  %v184 = vld [vmem:[%s4] sm:$0xff]
  %v185 = vld [vmem:[%s4 + $0x8] sm:$0xff]
  %v186 = vld [vmem:[%s4 + $0x10] sm:$0xff]
  %v187 = vld [vmem:[%s4 + $0x18] sm:$0xff]
  %189 = vset.pattern.permute.xlu0 0
  %190 = vperm.xlu0 %189, %v184
  %v191 = vpop.permute.xlu0 %190
  %194 = vset.pattern.permute.xlu0 0
  %195 = vperm.xlu0 %194, %v185
  %v196 = vpop.permute.xlu0 %195
  %199 = vset.pattern.permute.xlu0 0
  %200 = vperm.xlu0 %199, %v186
  %v201 = vpop.permute.xlu0 %200
  %204 = vset.pattern.permute.xlu0 0
  %205 = vperm.xlu0 %204, %v187
  %v206 = vpop.permute.xlu0 %205
  %vm208 = vcmask 261120
  %v210 = vsel %vm208, %v180, 0
  %v213 = vsel %vm208, %v181, 0
  %v216 = vsel %vm208, %v182, 0
  %v219 = vsel %vm208, %v183, 0
  %221 = vmatprep.subr.mxu0 0.0
  %222 = vmatpush1.msra.mxu0 %v176
  %223 = vmatprep.subr.mxu0 0.0
  %224 = vmatpush1.msra.mxu0 %v177
  %225 = vmatprep.subr.mxu0 0.0
  %226 = vmatpush1.msra.mxu0 %v178
  %227 = vmatprep.subr.mxu0 0.0
  %228 = vmatpush1.msra.mxu0 %v179
  %229 = vmatprep.subr.mxu0 0.0
  %230 = vmatpush1.msra.mxu0 0.0
  %231 = vmatprep.subr.mxu0 0.0
  %232 = vmatpush1.msra.mxu0 0.0
  %233 = vmatprep.subr.mxu0 0.0
  %234 = vmatpush1.msra.mxu0 0.0
  %235 = vmatprep.subr.mxu0 0.0
  %236 = vmatpush1.msra.mxu0 0.0
  %237 = vmatprep.subr.mxu0 0.0
  %238 = vmatpush1.msra.mxu0 0.0
  %239 = vmatprep.subr.mxu0 0.0
  %240 = vmatpush1.msra.mxu0 0.0
  %241 = vmatprep.subr.mxu0 0.0
  %242 = vmatpush1.msra.mxu0 0.0
  %243 = vmatprep.subr.mxu0 0.0
  %244 = vmatpush1.msra.mxu0 0.0
  %245 = vmatprep.subr.mxu0 0.0
  %246 = vmatpush1.msra.mxu0 0.0
  %247 = vmatprep.subr.mxu0 0.0
  %248 = vmatpush1.msra.mxu0 0.0
  %249 = vmatprep.subr.mxu0 0.0
  %250 = vmatpush1.msra.mxu0 0.0
  %251 = vmatprep.subr.mxu0 0.0
  %252 = vmatpush1.msra.mxu0 0.0
  %253 = vmatprep.subr.mxu0 0.0
  %254 = vmatpush1.msra.mxu0 0.0
  %255 = vmatprep.subr.mxu0 0.0
  %256 = vmatpush1.msra.mxu0 0.0
  %257 = vmatprep.subr.mxu0 0.0
  %258 = vmatpush1.msra.mxu0 0.0
  %259 = vmatprep.subr.mxu0 0.0
  %260 = vmatpush1.msra.mxu0 0.0
  %261 = vmatprep.subr.mxu0 0.0
  %262 = vmatpush1.msra.mxu0 0.0
  %263 = vmatprep.subr.mxu0 0.0
  %264 = vmatpush1.msra.mxu0 0.0
  %265 = vmatprep.subr.mxu0 0.0
  %266 = vmatpush1.msra.mxu0 0.0
  %267 = vmatprep.subr.mxu0 0.0
  %268 = vmatpush1.msra.mxu0 0.0
  %269 = vmatprep.subr.mxu0 0.0
  %270 = vmatpush1.msra.mxu0 0.0
  %271 = vmatprep.subr.mxu0 0.0
  %272 = vmatpush1.msra.mxu0 0.0
  %273 = vmatprep.subr.mxu0 0.0
  %274 = vmatpush1.msra.mxu0 0.0
  %275 = vmatprep.subr.mxu0 0.0
  %276 = vmatpush1.msra.mxu0 0.0
  %277 = vmatprep.subr.mxu0 0.0
  %278 = vmatpush1.msra.mxu0 0.0
  %279 = vmatprep.subr.mxu0 0.0
  %280 = vmatpush1.msra.mxu0 0.0
  %281 = vmatprep.subr.mxu0 0.0
  %282 = vmatpush1.msra.mxu0 0.0
  %283 = vmatprep.subr.mxu0 0.0
  %284 = vmatpush1.msra.mxu0 0.0
  %285 = vmatprep.mubr.f32.mxu0 0.0
  %286 = vmatmul.mubr.f32.gmra.mrb[0].mxu0 %v210
  %v287 = vpop.f32.mrb[0].mxu0
  %v288 = vadd.f32 %v191, %v287
  %v289 = vpop.f32.mrb[0].mxu0
  %290 = vmatprep.mubr.f32.mxu0 0.0
  %291 = vmatmul.mubr.f32.gmra.mrb[0].mxu0 %v213
  %v292 = vpop.f32.mrb[0].mxu0
  %v293 = vadd.f32 %v196, %v292
  %v294 = vpop.f32.mrb[0].mxu0
  %295 = vmatprep.mubr.f32.mxu0 0.0
  %296 = vmatmul.mubr.f32.gmra.mrb[0].mxu0 %v216
  %v297 = vpop.f32.mrb[0].mxu0
  %v298 = vadd.f32 %v201, %v297
  %v299 = vpop.f32.mrb[0].mxu0
  %300 = vmatprep.mubr.f32.mxu0 0.0
  %301 = vmatmul.mubr.f32.gmra.mrb[0].mxu0 %v219
  %v302 = vpop.f32.mrb[0].mxu0
  %v303 = vadd.f32 %v206, %v302
  %v304 = vpop.f32.mrb[0].mxu0
  %305 = vdwg.mxu0
  %v306 = vmax.f32 %v288, 0.0
  %v307 = vmax.f32 %v293, 0.0
  %v308 = vmax.f32 %v298, 0.0
  %v309 = vmax.f32 %v303, 0.0
  %v310 = vld [vmem:[%s5] sm:$0xff]
  %v311 = vld [vmem:[%s5 + $0x8] sm:$0xff]
  %v312 = vld [vmem:[%s5 + $0x10] sm:$0xff]
  %v313 = vld [vmem:[%s5 + $0x18] sm:$0xff]
  %v314 = vld [vmem:[%s6] sm:$0xff]
  %v315 = vld [vmem:[%s6 + $0x8] sm:$0xff]
  %v316 = vld [vmem:[%s6 + $0x10] sm:$0xff]
  %v317 = vld [vmem:[%s6 + $0x18] sm:$0xff]
  %319 = vset.pattern.permute.xlu0 0
  %320 = vperm.xlu0 %319, %v314
  %v321 = vpop.permute.xlu0 %320
  %324 = vset.pattern.permute.xlu0 0
  %325 = vperm.xlu0 %324, %v315
  %v326 = vpop.permute.xlu0 %325
  %329 = vset.pattern.permute.xlu0 0
  %330 = vperm.xlu0 %329, %v316
  %v331 = vpop.permute.xlu0 %330
  %334 = vset.pattern.permute.xlu0 0
  %335 = vperm.xlu0 %334, %v317
  %v336 = vpop.permute.xlu0 %335
  %v339 = vsel %vm208, %v310, 0
  %v342 = vsel %vm208, %v311, 0
  %v345 = vsel %vm208, %v312, 0
  %v348 = vsel %vm208, %v313, 0
  %350 = vmatprep.subr.mxu0 0.0
  %351 = vmatpush1.msra.mxu0 %v306
  %352 = vmatprep.subr.mxu0 0.0
  %353 = vmatpush1.msra.mxu0 %v307
  %354 = vmatprep.subr.mxu0 0.0
  %355 = vmatpush1.msra.mxu0 %v308
  %356 = vmatprep.subr.mxu0 0.0
  %357 = vmatpush1.msra.mxu0 %v309
  %358 = vmatprep.subr.mxu0 0.0
  %359 = vmatpush1.msra.mxu0 0.0
  %360 = vmatprep.subr.mxu0 0.0
  %361 = vmatpush1.msra.mxu0 0.0
  %362 = vmatprep.subr.mxu0 0.0
  %363 = vmatpush1.msra.mxu0 0.0
  %364 = vmatprep.subr.mxu0 0.0
  %365 = vmatpush1.msra.mxu0 0.0
  %366 = vmatprep.subr.mxu0 0.0
  %367 = vmatpush1.msra.mxu0 0.0
  %368 = vmatprep.subr.mxu0 0.0
  %369 = vmatpush1.msra.mxu0 0.0
  %370 = vmatprep.subr.mxu0 0.0
  %371 = vmatpush1.msra.mxu0 0.0
  %372 = vmatprep.subr.mxu0 0.0
  %373 = vmatpush1.msra.mxu0 0.0
  %374 = vmatprep.subr.mxu0 0.0
  %375 = vmatpush1.msra.mxu0 0.0
  %376 = vmatprep.subr.mxu0 0.0
  %377 = vmatpush1.msra.mxu0 0.0
  %378 = vmatprep.subr.mxu0 0.0
  %379 = vmatpush1.msra.mxu0 0.0
  %380 = vmatprep.subr.mxu0 0.0
  %381 = vmatpush1.msra.mxu0 0.0
  %382 = vmatprep.subr.mxu0 0.0
  %383 = vmatpush1.msra.mxu0 0.0
  %384 = vmatprep.subr.mxu0 0.0
  %385 = vmatpush1.msra.mxu0 0.0
  %386 = vmatprep.subr.mxu0 0.0
  %387 = vmatpush1.msra.mxu0 0.0
  %388 = vmatprep.subr.mxu0 0.0
  %389 = vmatpush1.msra.mxu0 0.0
  %390 = vmatprep.subr.mxu0 0.0
  %391 = vmatpush1.msra.mxu0 0.0
  %392 = vmatprep.subr.mxu0 0.0
  %393 = vmatpush1.msra.mxu0 0.0
  %394 = vmatprep.subr.mxu0 0.0
  %395 = vmatpush1.msra.mxu0 0.0
  %396 = vmatprep.subr.mxu0 0.0
  %397 = vmatpush1.msra.mxu0 0.0
  %398 = vmatprep.subr.mxu0 0.0
  %399 = vmatpush1.msra.mxu0 0.0
  %400 = vmatprep.subr.mxu0 0.0
  %401 = vmatpush1.msra.mxu0 0.0
  %402 = vmatprep.subr.mxu0 0.0
  %403 = vmatpush1.msra.mxu0 0.0
  %404 = vmatprep.subr.mxu0 0.0
  %405 = vmatpush1.msra.mxu0 0.0
  %406 = vmatprep.subr.mxu0 0.0
  %407 = vmatpush1.msra.mxu0 0.0
  %408 = vmatprep.subr.mxu0 0.0
  %409 = vmatpush1.msra.mxu0 0.0
  %410 = vmatprep.subr.mxu0 0.0
  %411 = vmatpush1.msra.mxu0 0.0
  %412 = vmatprep.subr.mxu0 0.0
  %413 = vmatpush1.msra.mxu0 0.0
  %414 = vmatprep.mubr.f32.mxu0 0.0
  %415 = vmatmul.mubr.f32.gmra.mrb[0].mxu0 %v339
  %v416 = vpop.f32.mrb[0].mxu0
  %v417 = vadd.f32 %v321, %v416
  %v418 = vpop.f32.mrb[0].mxu0
  %419 = vmatprep.mubr.f32.mxu0 0.0
  %420 = vmatmul.mubr.f32.gmra.mrb[0].mxu0 %v342
  %v421 = vpop.f32.mrb[0].mxu0
  %v422 = vadd.f32 %v326, %v421
  %v423 = vpop.f32.mrb[0].mxu0
  %424 = vmatprep.mubr.f32.mxu0 0.0
  %425 = vmatmul.mubr.f32.gmra.mrb[0].mxu0 %v345
  %v426 = vpop.f32.mrb[0].mxu0
  %v427 = vadd.f32 %v331, %v426
  %v428 = vpop.f32.mrb[0].mxu0
  %429 = vmatprep.mubr.f32.mxu0 0.0
  %430 = vmatmul.mubr.f32.gmra.mrb[0].mxu0 %v348
  %v431 = vpop.f32.mrb[0].mxu0
  %v432 = vadd.f32 %v336, %v431
  %v433 = vpop.f32.mrb[0].mxu0
  %434 = vdwg.mxu0
  %v435 = vmax.f32 %v417, 0.0
  %v436 = vmax.f32 %v422, 0.0
  %v437 = vmax.f32 %v427, 0.0
  %v438 = vmax.f32 %v432, 0.0
  %v439 = vld [vmem:[%s7] sm:$0x1f]
  %v440 = vld [vmem:[%s8] sm:$0x1f]
  %442 = vset.pattern.permute.xlu0 0
  %443 = vperm.xlu0 %442, %v440
  %v444 = vpop.permute.xlu0 %443
  %v447 = vsel %vm208, %v439, 0
  %449 = vmatprep.subr.mxu0 0.0
  %450 = vmatpush1.msra.mxu0 %v435
  %451 = vmatprep.subr.mxu0 0.0
  %452 = vmatpush1.msra.mxu0 %v436
  %453 = vmatprep.subr.mxu0 0.0
  %454 = vmatpush1.msra.mxu0 %v437
  %455 = vmatprep.subr.mxu0 0.0
  %456 = vmatpush1.msra.mxu0 %v438
  %457 = vmatprep.subr.mxu0 0.0
  %458 = vmatpush1.msra.mxu0 0.0
  %459 = vmatprep.subr.mxu0 0.0
  %460 = vmatpush1.msra.mxu0 0.0
  %461 = vmatprep.subr.mxu0 0.0
  %462 = vmatpush1.msra.mxu0 0.0
  %463 = vmatprep.subr.mxu0 0.0
  %464 = vmatpush1.msra.mxu0 0.0
  %465 = vmatprep.subr.mxu0 0.0
  %466 = vmatpush1.msra.mxu0 0.0
  %467 = vmatprep.subr.mxu0 0.0
  %468 = vmatpush1.msra.mxu0 0.0
  %469 = vmatprep.subr.mxu0 0.0
  %470 = vmatpush1.msra.mxu0 0.0
  %471 = vmatprep.subr.mxu0 0.0
  %472 = vmatpush1.msra.mxu0 0.0
  %473 = vmatprep.subr.mxu0 0.0
  %474 = vmatpush1.msra.mxu0 0.0
  %475 = vmatprep.subr.mxu0 0.0
  %476 = vmatpush1.msra.mxu0 0.0
  %477 = vmatprep.subr.mxu0 0.0
  %478 = vmatpush1.msra.mxu0 0.0
  %479 = vmatprep.subr.mxu0 0.0
  %480 = vmatpush1.msra.mxu0 0.0
  %481 = vmatprep.subr.mxu0 0.0
  %482 = vmatpush1.msra.mxu0 0.0
  %483 = vmatprep.subr.mxu0 0.0
  %484 = vmatpush1.msra.mxu0 0.0
  %485 = vmatprep.subr.mxu0 0.0
  %486 = vmatpush1.msra.mxu0 0.0
  %487 = vmatprep.subr.mxu0 0.0
  %488 = vmatpush1.msra.mxu0 0.0
  %489 = vmatprep.subr.mxu0 0.0
  %490 = vmatpush1.msra.mxu0 0.0
  %491 = vmatprep.subr.mxu0 0.0
  %492 = vmatpush1.msra.mxu0 0.0
  %493 = vmatprep.subr.mxu0 0.0
  %494 = vmatpush1.msra.mxu0 0.0
  %495 = vmatprep.subr.mxu0 0.0
  %496 = vmatpush1.msra.mxu0 0.0
  %497 = vmatprep.subr.mxu0 0.0
  %498 = vmatpush1.msra.mxu0 0.0
  %499 = vmatprep.subr.mxu0 0.0
  %500 = vmatpush1.msra.mxu0 0.0
  %501 = vmatprep.subr.mxu0 0.0
  %502 = vmatpush1.msra.mxu0 0.0
  %503 = vmatprep.subr.mxu0 0.0
  %504 = vmatpush1.msra.mxu0 0.0
  %505 = vmatprep.subr.mxu0 0.0
  %506 = vmatpush1.msra.mxu0 0.0
  %507 = vmatprep.subr.mxu0 0.0
  %508 = vmatpush1.msra.mxu0 0.0
  %509 = vmatprep.subr.mxu0 0.0
  %510 = vmatpush1.msra.mxu0 0.0
  %511 = vmatprep.subr.mxu0 0.0
  %512 = vmatpush1.msra.mxu0 0.0
  %513 = vmatprep.mubr.f32.mxu0 0.0
  %514 = vmatmul.mubr.f32.gmra.mrb[0].mxu0 %v447
  %v515 = vpop.f32.mrb[0].mxu0
  %v516 = vadd.f32 %v444, %v515
  %v517 = vpop.f32.mrb[0].mxu0
  %518 = vdwg.mxu0
  %vm519 = vcmask 12288
  %520 = vst.msk [vmem:[%s9] sm:$0x1f] %vm519, %v516
  // Predicated region
  $region38: #{tpu_custom_call.1} parent=0 // pred_check
    _
  $region39: #{tpu_custom_call.1} parent=0 // pred_check_branch
    %522 = sbr.rel (0) target = $region41
  $region40: #{tpu_custom_call.1} parent=0 // pred_region
    _
  $region41: #{tpu_custom_call.1} parent=0 // pred_fallthru
    _
  // Predicated region
  $region42: #{tpu_custom_call.1} parent=0 // pred_check
    _
  $region43: #{tpu_custom_call.1} parent=0 // pred_check_branch
    %524 = sbr.rel (0) target = $region45
  $region44: #{tpu_custom_call.1} parent=0 // pred_region
    _
  $region45: #{tpu_custom_call.1} parent=0 // pred_fallthru
    _

</llo_original>
